<compile_context>
chip_gen: v6e
topology: v6e:2x2x1
jax: 0.10.0
libtpu: 0.0.40
codegen_flags: <defaults>
</compile_context>

<pallas_src>
import jax
import jax.numpy as jnp
from jax.experimental import pallas as pl
from jax.experimental.pallas import tpu as pltpu


def _round_up(x, m):
    return ((x + m - 1) // m) * m


def _make_kernel(n_total, c_total, tile_n, tile_c, tiles_per_core):
    needs_c_mask = (c_total % tile_c) != 0

    def kernel(x_ref, t_ref, out_ref, m_ref, l_ref, g_ref):
        p = pl.program_id(0)            # core split   (parallel)
        i = pl.program_id(1)            # batch tile   (arbitrary)
        j = pl.program_id(2)            # class chunk  (arbitrary, innermost)
        last_j = pl.num_programs(2) - 1

        # Zero this core's resident accumulator block once.
        @pl.when((i == 0) & (j == 0))
        def _init_out():
            out_ref[...] = jnp.zeros_like(out_ref)

        # Reset per-row online-softmax state at the start of every batch tile.
        @pl.when(j == 0)
        def _init_rows():
            m_ref[...] = jnp.full((tile_n, 1), -jnp.inf, dtype=jnp.float32)
            l_ref[...] = jnp.zeros((tile_n, 1), dtype=jnp.float32)
            g_ref[...] = jnp.zeros((tile_n, 1), dtype=jnp.float32)

        x_raw = x_ref[...]                          # (tile_n, tile_c), input dtype
        x = x_raw.astype(jnp.float32)
        t = t_ref[...]                              # (tile_n, 1), int32

        col = j * tile_c + jax.lax.broadcasted_iota(jnp.int32, (tile_n, tile_c), 1)
        if needs_c_mask:
            xs = jnp.where(col < c_total, x, -jnp.inf)   # mask padded class cols
        else:
            xs = x

        # Online logsumexp update for this class chunk.
        m_old = m_ref[...]
        m_new = jnp.maximum(m_old, jnp.max(xs, axis=-1, keepdims=True))
        alpha = jnp.exp(m_old - m_new)
        l_ref[...] = l_ref[...] * alpha + jnp.sum(jnp.exp(xs - m_new),
                                                  axis=-1, keepdims=True)
        m_ref[...] = m_new

        # Running target-logit select; kept in the input dtype (bf16-friendly).
        # The target class appears in exactly one chunk, so a plain sum works.
        # TODO(synk): PyTorch raises on out-of-range targets and supports
        # ignore_index; here an invalid index silently selects nothing.
        sel = jnp.where(col == t, x_raw, jnp.zeros((), dtype=x_raw.dtype))
        g_ref[...] += jnp.sum(sel, axis=-1, keepdims=True).astype(jnp.float32)

        # On the last class chunk, fold this batch tile into the accumulator.
        @pl.when(j == last_j)
        def _accumulate():
            lse = m_ref[...] + jnp.log(l_ref[...])
            row = jax.lax.broadcasted_iota(jnp.int32, (tile_n, 1), 0)
            global_row = (p * tiles_per_core + i) * tile_n + row
            valid = global_row < n_total            # padded rows + duplicate tiles
            out_ref[...] += jnp.where(valid, lse - g_ref[...], 0.0)

    return kernel


def debug_loss(inputs, targets, *, tile_n=None, tile_c=None):
    """nn.CrossEntropyLoss()(inputs, targets): mean NLL over the batch.

    inputs:  (N, C) float logits
    targets: (N,)   integer class indices
    """
    n, c = inputs.shape
    targets2d = targets.astype(jnp.int32).reshape(n, 1)
    itemsize = inputs.dtype.itemsize

    # --- generation-aware scoped-VMEM limit (~60% of physical VMEM) ---
    try:
        phys_vmem = int(pltpu.get_tpu_info().vmem_capacity_bytes)
    except Exception:
        phys_vmem = 64 * 1024 * 1024            # conservative fallback (fits v7x)
    vmem_limit_bytes = min(int(phys_vmem * 0.6), 96 * 1024 * 1024)

    # --- tile selection ---
    # Live bytes per streamed element: input tile x2 (double buffer) plus ~4
    # f32-wide intermediates (f32 copy, exp pass, int32 col iota, select).
    bytes_per_elem = 2 * itemsize + 16
    budget = vmem_limit_bytes // 2              # headroom for scratch/output/etc.
    row_align = max(8, 32 // itemsize)          # 8 f32 / 16 bf16 / 32 int8-fp8
    n_padded = _round_up(n, row_align)

    if tile_c is None:
        rows_full_c = budget // max(1, c * bytes_per_elem)
        if rows_full_c >= 256 or c <= 512:
            tile_c = c                          # keep the class dim whole
        else:
            # Tile the class dim so >=256 rows stay live (bounds VMEM on v7x).
            tile_c = (budget // (256 * bytes_per_elem)) // 128 * 128
            tile_c = max(128, min(tile_c, _round_up(c, 128)))
            if tile_c >= c:
                tile_c = c
    if tile_n is None:
        tile_n = budget // max(1, tile_c * bytes_per_elem)
        tile_n = max(row_align, min(1024, (tile_n // row_align) * row_align))
        tile_n = min(tile_n, n_padded)

    n_row_tiles = pl.cdiv(n, tile_n)
    n_col_tiles = pl.cdiv(c, tile_c)
    core_split = 2 if n_row_tiles > 1 else 1    # engage both v7x TensorCores
    tiles_per_core = pl.cdiv(n_row_tiles, core_split)
    last_tile = n_row_tiles - 1

    # TODO(synk): for C < 128 only C of 128 lanes are live per vreg; a wrapper
    # reshape folding rows into the lane dim would recover utilization.

    out = pl.pallas_call(
        _make_kernel(n, c, tile_n, tile_c, tiles_per_core),
        out_shape=jax.ShapeDtypeStruct((core_split * tile_n, 1), jnp.float32),
        grid=(core_split, tiles_per_core, n_col_tiles),
        in_specs=[
            pl.BlockSpec(
                (tile_n, tile_c),
                lambda p, i, j: (jnp.minimum(p * tiles_per_core + i, last_tile), j)),
            pl.BlockSpec(
                (tile_n, 1),
                lambda p, i, j: (jnp.minimum(p * tiles_per_core + i, last_tile), 0)),
        ],
        # Per-core resident accumulator slice: block index depends only on p,
        # so it stays in VMEM across the batch/class axes and is written back
        # to HBM exactly once per core.
        out_specs=pl.BlockSpec((tile_n, 1), lambda p, i, j: (p, 0)),
        scratch_shapes=[
            pltpu.VMEM((tile_n, 1), jnp.float32),   # running row max
            pltpu.VMEM((tile_n, 1), jnp.float32),   # running sum-of-exp
            pltpu.VMEM((tile_n, 1), jnp.float32),   # running target logit
        ],
        compiler_params=pltpu.CompilerParams(
            dimension_semantics=("parallel", "arbitrary", "arbitrary"),
            vmem_limit_bytes=vmem_limit_bytes,
        ),
    )(inputs, targets2d)

    # Deferred scalar collapse: one tiny XLA reduce + divide by the true N.
    return jnp.sum(out) / n


def _reference_loss(logits, targets):
    logp = jax.nn.log_softmax(logits.astype(jnp.float32), axis=-1)
    return -jnp.mean(logp[jnp.arange(logits.shape[0]), targets])


if __name__ == "__main__":
    key = jax.random.PRNGKey(0)
    k1, k2, k3, k4 = jax.random.split(key, 4)

    # Case 1: auto tiling -> single full-extent block per core-split slot.
    N, C = 32, 32
    logits = jax.random.normal(k1, (N, C), dtype=jnp.float32)
    targets = jax.random.randint(k2, (N,), 0, C, dtype=jnp.int32)
    loss = debug_loss(logits, targets)
    jax.block_until_ready(loss)
    ref = _reference_loss(logits, targets)
    assert jnp.allclose(loss, ref, atol=1e-5, rtol=1e-5), (loss, ref)

    # Case 2: batch not divisible by tile -> partial-tile row masking plus an
    # out-of-range (clamped + masked) tile on the second core-split slot.
    N2 = 20
    logits2 = jax.random.normal(k3, (N2, C), dtype=jnp.float32)
    targets2 = jax.random.randint(k4, (N2,), 0, C, dtype=jnp.int32)
    loss2 = debug_loss(logits2, targets2, tile_n=8)
    jax.block_until_ready(loss2)
    ref2 = _reference_loss(logits2, targets2)
    assert jnp.allclose(loss2, ref2, atol=1e-5, rtol=1e-5), (loss2, ref2)

    # Case 3: class-dimension tiling (online logsumexp over 2 class chunks).
    N3, C3 = 24, 256
    logits3 = jax.random.normal(k1, (N3, C3), dtype=jnp.float32)
    targets3 = jax.random.randint(k2, (N3,), 0, C3, dtype=jnp.int32)
    loss3 = debug_loss(logits3, targets3, tile_n=8, tile_c=128)
    jax.block_until_ready(loss3)
    ref3 = _reference_loss(logits3, targets3)
    assert jnp.allclose(loss3, ref3, atol=1e-5, rtol=1e-5), (loss3, ref3)

    # Case 4: bf16 logits (16-row sublane alignment, bf16 target-select pass).
    logits4 = jax.random.normal(k3, (N, C), dtype=jnp.bfloat16)
    targets4 = jax.random.randint(k4, (N,), 0, C, dtype=jnp.int32)
    loss4 = debug_loss(logits4, targets4)
    jax.block_until_ready(loss4)
    ref4 = _reference_loss(logits4, targets4)
    assert jnp.allclose(loss4, ref4, atol=2e-3, rtol=2e-3), (loss4, ref4)

    print("KERNEL_OK")
</pallas_src>

<mosaic_0001>
module attributes {stable_mosaic.version = 11 : i64} {
  func.func @kernel(%arg0: i32, %arg1: i32, %arg2: i32, %arg3: memref<32x32xf32, #tpu.memory_space<vmem>>, %arg4: memref<32x1xi32, #tpu.memory_space<vmem>>, %arg5: memref<32x1xf32, #tpu.memory_space<vmem>>, %arg6: memref<32x1xf32, #tpu.memory_space<vmem>>, %arg7: memref<32x1xf32, #tpu.memory_space<vmem>>, %arg8: memref<32x1xf32, #tpu.memory_space<vmem>>) attributes {dimension_semantics = [#tpu.dimension_semantics<parallel>, #tpu.dimension_semantics<arbitrary>, #tpu.dimension_semantics<arbitrary>], iteration_bounds = array<i64: 1, 1, 1>, scalar_prefetch = 0 : i64, scratch_operands = 3 : i64, tpu.core_type = #tpu.core_type<tc>, window_params = [{transform_indices = @transform_0, window_bounds = array<i64: 32, 32>}, {transform_indices = @transform_1, window_bounds = array<i64: 32, 1>}, {transform_indices = @transform_2, window_bounds = array<i64: 32, 1>}]} {
    %c0_i32 = arith.constant 0 : i32
    %0 = arith.cmpi eq, %arg1, %c0_i32 : i32
    %c0_i32_0 = arith.constant 0 : i32
    %1 = arith.cmpi eq, %arg2, %c0_i32_0 : i32
    %2 = arith.andi %0, %1 : i1
    %3 = arith.extui %2 : i1 to i32
    %c0_i32_1 = arith.constant 0 : i32
    %4 = arith.cmpi ne, %3, %c0_i32_1 : i32
    scf.if %4 {
      %cst_24 = arith.constant 0.000000e+00 : f32
      %42 = vector.broadcast %cst_24 : f32 to vector<32x1xf32>
      %c0_25 = arith.constant 0 : index
      %c0_26 = arith.constant 0 : index
      %43 = vector.load %arg5[%c0_25, %c0_26] : memref<32x1xf32, #tpu.memory_space<vmem>>, vector<32x1xf32>
      tpu.vector_store %arg5[%c0_25, %c0_26], %42 {strides = array<i32>} : memref<32x1xf32, #tpu.memory_space<vmem>>, vector<32x1xf32>,
    } else {
    }
    %c0_i32_2 = arith.constant 0 : i32
    %5 = arith.cmpi eq, %arg2, %c0_i32_2 : i32
    %6 = arith.extui %5 : i1 to i32
    %c0_i32_3 = arith.constant 0 : i32
    %7 = arith.cmpi ne, %6, %c0_i32_3 : i32
    scf.if %7 {
      %cst_24 = arith.constant 0xFF800000 : f32
      %42 = vector.broadcast %cst_24 : f32 to vector<32x1xf32>
      %c0_25 = arith.constant 0 : index
      %c0_26 = arith.constant 0 : index
      %43 = vector.load %arg6[%c0_25, %c0_26] : memref<32x1xf32, #tpu.memory_space<vmem>>, vector<32x1xf32>
      tpu.vector_store %arg6[%c0_25, %c0_26], %42 {strides = array<i32>} : memref<32x1xf32, #tpu.memory_space<vmem>>, vector<32x1xf32>,
      %cst_27 = arith.constant 0.000000e+00 : f32
      %44 = vector.broadcast %cst_27 : f32 to vector<32x1xf32>
      %c0_28 = arith.constant 0 : index
      %c0_29 = arith.constant 0 : index
      %45 = vector.load %arg7[%c0_28, %c0_29] : memref<32x1xf32, #tpu.memory_space<vmem>>, vector<32x1xf32>
      tpu.vector_store %arg7[%c0_28, %c0_29], %44 {strides = array<i32>} : memref<32x1xf32, #tpu.memory_space<vmem>>, vector<32x1xf32>,
      %cst_30 = arith.constant 0.000000e+00 : f32
      %46 = vector.broadcast %cst_30 : f32 to vector<32x1xf32>
      %c0_31 = arith.constant 0 : index
      %c0_32 = arith.constant 0 : index
      %47 = vector.load %arg8[%c0_31, %c0_32] : memref<32x1xf32, #tpu.memory_space<vmem>>, vector<32x1xf32>
      tpu.vector_store %arg8[%c0_31, %c0_32], %46 {strides = array<i32>} : memref<32x1xf32, #tpu.memory_space<vmem>>, vector<32x1xf32>,
    } else {
    }
    %c0 = arith.constant 0 : index
    %c0_4 = arith.constant 0 : index
    %8 = vector.load %arg3[%c0, %c0_4] : memref<32x32xf32, #tpu.memory_space<vmem>>, vector<32x32xf32>
    %c0_5 = arith.constant 0 : index
    %c0_6 = arith.constant 0 : index
    %9 = vector.load %arg4[%c0_5, %c0_6] : memref<32x1xi32, #tpu.memory_space<vmem>>, vector<32x1xi32>
    %c32_i32 = arith.constant 32 : i32
    %10 = arith.muli %arg2, %c32_i32 : i32
    %11 = tpu.iota {dimensions = array<i32: 1>} : vector<32x32xi32>
    %12 = vector.broadcast %10 : i32 to vector<32x32xi32>
    %13 = arith.addi %12, %11 : vector<32x32xi32>
    %c0_7 = arith.constant 0 : index
    %c0_8 = arith.constant 0 : index
    %14 = vector.load %arg6[%c0_7, %c0_8] : memref<32x1xf32, #tpu.memory_space<vmem>>, vector<32x1xf32>
    %cst = arith.constant dense<0xFF800000> : vector<32xf32>
    %15 = vector.multi_reduction <maximumf>, %8, %cst [1] : vector<32x32xf32> to vector<32xf32>
    %16 = vector.shape_cast %15 : vector<32xf32> to vector<32x1xf32>
    %17 = arith.maximumf %14, %16 : vector<32x1xf32>
    %18 = arith.subf %14, %17 : vector<32x1xf32>
    %19 = math.exp %18 : vector<32x1xf32>
    %c0_9 = arith.constant 0 : index
    %c0_10 = arith.constant 0 : index
    %20 = vector.load %arg7[%c0_9, %c0_10] : memref<32x1xf32, #tpu.memory_space<vmem>>, vector<32x1xf32>
    %21 = arith.mulf %20, %19 : vector<32x1xf32>
    %22 = vector.broadcast %17 : vector<32x1xf32> to vector<32x32xf32>
    %23 = arith.subf %8, %22 : vector<32x32xf32>
    %24 = math.exp %23 : vector<32x32xf32>
    %cst_11 = arith.constant dense<0.000000e+00> : vector<32xf32>
    %25 = vector.multi_reduction <add>, %24, %cst_11 [1] : vector<32x32xf32> to vector<32xf32>
    %26 = vector.shape_cast %25 : vector<32xf32> to vector<32x1xf32>
    %27 = arith.addf %21, %26 : vector<32x1xf32>
    %c0_12 = arith.constant 0 : index
    %c0_13 = arith.constant 0 : index
    %28 = vector.load %arg7[%c0_12, %c0_13] : memref<32x1xf32, #tpu.memory_space<vmem>>, vector<32x1xf32>
    tpu.vector_store %arg7[%c0_12, %c0_13], %27 {strides = array<i32>} : memref<32x1xf32, #tpu.memory_space<vmem>>, vector<32x1xf32>,
    %c0_14 = arith.constant 0 : index
    %c0_15 = arith.constant 0 : index
    %29 = vector.load %arg6[%c0_14, %c0_15] : memref<32x1xf32, #tpu.memory_space<vmem>>, vector<32x1xf32>
    tpu.vector_store %arg6[%c0_14, %c0_15], %17 {strides = array<i32>} : memref<32x1xf32, #tpu.memory_space<vmem>>, vector<32x1xf32>,
    %30 = vector.broadcast %9 : vector<32x1xi32> to vector<32x32xi32>
    %31 = arith.cmpi eq, %13, %30 : vector<32x32xi32>
    %cst_16 = arith.constant 0.000000e+00 : f32
    %32 = vector.broadcast %cst_16 : f32 to vector<32x32xf32>
    %33 = arith.select %31, %8, %32 : vector<32x32xi1>, vector<32x32xf32>
    %c0_17 = arith.constant 0 : index
    %c0_18 = arith.constant 0 : index
    %34 = vector.load %arg8[%c0_17, %c0_18] : memref<32x1xf32, #tpu.memory_space<vmem>>, vector<32x1xf32>
    %cst_19 = arith.constant dense<0.000000e+00> : vector<32xf32>
    %35 = vector.multi_reduction <add>, %33, %cst_19 [1] : vector<32x32xf32> to vector<32xf32>
    %36 = vector.shape_cast %35 : vector<32xf32> to vector<32x1xf32>
    %37 = arith.addf %34, %36 : vector<32x1xf32>
    %c0_20 = arith.constant 0 : index
    %c0_21 = arith.constant 0 : index
    %38 = vector.load %arg8[%c0_20, %c0_21] : memref<32x1xf32, #tpu.memory_space<vmem>>, vector<32x1xf32>
    tpu.vector_store %arg8[%c0_20, %c0_21], %37 {strides = array<i32>} : memref<32x1xf32, #tpu.memory_space<vmem>>, vector<32x1xf32>,
    %c0_i32_22 = arith.constant 0 : i32
    %39 = arith.cmpi eq, %arg2, %c0_i32_22 : i32
    %40 = arith.extui %39 : i1 to i32
    %c0_i32_23 = arith.constant 0 : i32
    %41 = arith.cmpi ne, %40, %c0_i32_23 : i32
    scf.if %41 {
      %c0_24 = arith.constant 0 : index
      %c0_25 = arith.constant 0 : index
      %42 = vector.load %arg6[%c0_24, %c0_25] : memref<32x1xf32, #tpu.memory_space<vmem>>, vector<32x1xf32>
      %c0_26 = arith.constant 0 : index
      %c0_27 = arith.constant 0 : index
      %43 = vector.load %arg7[%c0_26, %c0_27] : memref<32x1xf32, #tpu.memory_space<vmem>>, vector<32x1xf32>
      %44 = math.log %43 : vector<32x1xf32>
      %45 = arith.addf %42, %44 : vector<32x1xf32>
      %46 = tpu.iota {dimensions = array<i32: 0>} : vector<32x1xi32>
      %c1_i32 = arith.constant 1 : i32
      %47 = arith.muli %arg0, %c1_i32 : i32
      %48 = arith.addi %47, %arg1 : i32
      %c32_i32_28 = arith.constant 32 : i32
      %49 = arith.muli %48, %c32_i32_28 : i32
      %50 = vector.broadcast %49 : i32 to vector<32x1xi32>
      %51 = arith.addi %50, %46 : vector<32x1xi32>
      %c32_i32_29 = arith.constant 32 : i32
      %52 = vector.broadcast %c32_i32_29 : i32 to vector<32x1xi32>
      %53 = arith.cmpi slt, %51, %52 : vector<32x1xi32>
      %c0_30 = arith.constant 0 : index
      %c0_31 = arith.constant 0 : index
      %54 = vector.load %arg5[%c0_30, %c0_31] : memref<32x1xf32, #tpu.memory_space<vmem>>, vector<32x1xf32>
      %c0_32 = arith.constant 0 : index
      %c0_33 = arith.constant 0 : index
      %55 = vector.load %arg8[%c0_32, %c0_33] : memref<32x1xf32, #tpu.memory_space<vmem>>, vector<32x1xf32>
      %56 = arith.subf %45, %55 : vector<32x1xf32>
      %cst_34 = arith.constant 0.000000e+00 : f32
      %57 = vector.broadcast %cst_34 : f32 to vector<32x1xf32>
      %58 = arith.select %53, %56, %57 : vector<32x1xi1>, vector<32x1xf32>
      %59 = arith.addf %54, %58 : vector<32x1xf32>
      %c0_35 = arith.constant 0 : index
      %c0_36 = arith.constant 0 : index
      %60 = vector.load %arg5[%c0_35, %c0_36] : memref<32x1xf32, #tpu.memory_space<vmem>>, vector<32x1xf32>
      tpu.vector_store %arg5[%c0_35, %c0_36], %59 {strides = array<i32>} : memref<32x1xf32, #tpu.memory_space<vmem>>, vector<32x1xf32>,
    } else {
    }
    return
  }
  func.func @transform_0(%arg0: i32, %arg1: i32, %arg2: i32) -> (i32, i32) {
    %c1_i32 = arith.constant 1 : i32
    %0 = arith.muli %arg0, %c1_i32 : i32
    %1 = arith.addi %0, %arg1 : i32
    %c0_i32 = arith.constant 0 : i32
    %2 = arith.minsi %1, %c0_i32 : i32
    %c0_i32_0 = arith.constant 0 : i32
    return %2, %arg2 : i32, i32
  }
  func.func @transform_1(%arg0: i32, %arg1: i32, %arg2: i32) -> (i32, i32) {
    %c1_i32 = arith.constant 1 : i32
    %0 = arith.muli %arg0, %c1_i32 : i32
    %1 = arith.addi %0, %arg1 : i32
    %c0_i32 = arith.constant 0 : i32
    %2 = arith.minsi %1, %c0_i32 : i32
    %c0_i32_0 = arith.constant 0 : i32
    %c0_i32_1 = arith.constant 0 : i32
    return %2, %c0_i32_0 : i32, i32
  }
  func.func @transform_2(%arg0: i32, %arg1: i32, %arg2: i32) -> (i32, i32) {
    %c0_i32 = arith.constant 0 : i32
    %c0_i32_0 = arith.constant 0 : i32
    return %arg0, %c0_i32 : i32, i32
  }
}

</mosaic_0001>

<llo_original>
// kernel: tpu_custom_call.1
$region0: #{tpu_custom_call.1}
  #allocation0 [shape = 'u32[]', space=smem, size = 0x4, offset = 0x4, fixed_abs, tag = 'smem constant byte address 0x4 - core index']
  #allocation1 [shape = 'u32[144,128]{1,0:T(1,128)}', space=vmem, size = 0x12000, scoped, tag = 'internal scratch']
  #allocation2 [shape = 'f32[32,1]{1,0:T(8,128)}', space=vmem, size = 0x4000, scoped, tag = 'scratch operand']
  #allocation3 [shape = 'f32[32,1]{1,0:T(8,128)}', space=vmem, size = 0x4000, scoped, tag = 'scratch operand']
  #allocation4 [shape = 'f32[32,1]{1,0:T(8,128)}', space=vmem, size = 0x4000, scoped, tag = 'scratch operand']
  %s0 = inlined_call_operand.vmem [shape: f32[32,32], index: 0, kind: input, shape index: {}]
  %s1 = inlined_call_operand.vmem [shape: s32[32,1], index: 1, kind: input, shape index: {}]
  %s2 = inlined_call_operand.vmem [shape: f32[32,1], index: 2, kind: output, shape index: {}]
  %s3 = sld [smem:[#allocation0]]
  $region30: #{tpu_custom_call.1} parent=0
    _
  %s5 = ssub.s32 1, %s3
  %s6 = scalar_select 0, %s5, %s3
  // Predicated region
  $region2: #{tpu_custom_call.1} parent=0 // pred_check
    _
  $region3: #{tpu_custom_call.1} parent=0 // pred_check_branch
    %8 = sbr.rel (0) target = $region5
  $region4: #{tpu_custom_call.1} parent=0 // pred_region
    %s9 = sadd.s32 0, 0
    %p10 = scmp.lt.s32.totalorder %s9, 0
    %s11 = scalar_select %p10, %s9, 0
    %s12 = smul.u32 4, %s11
    %p13 = scmp.lt.s32.totalorder %s12, 3
    %s14 = scalar_select %p13, %s12, 3
    %s15 = smul.addr %s14, 8
    %s16 = scalar_lea.vmem %s0, %s15
    %s17 = sadd.s32 0, 0
    %p18 = scmp.lt.s32.totalorder %s17, 0
    %s19 = scalar_select %p18, %s17, 0
    %s20 = smul.u32 4, %s19
  $region5: #{tpu_custom_call.1} parent=0 // pred_fallthru
    _
  // Predicated region
  $region6: #{tpu_custom_call.1} parent=0 // pred_check
    _
  $region7: #{tpu_custom_call.1} parent=0 // pred_check_branch
    %22 = sbr.rel (0) target = $region9
  $region8: #{tpu_custom_call.1} parent=0 // pred_region
    %s23 = sadd.s32 0, 0
    %p24 = scmp.lt.s32.totalorder %s23, 0
    %s25 = scalar_select %p24, %s23, 0
    %s26 = smul.u32 4, %s25
    %p27 = scmp.lt.s32.totalorder %s26, 3
    %s28 = scalar_select %p27, %s26, 3
    %s29 = smul.addr %s28, 8
    %s30 = scalar_lea.vmem %s1, %s29
    %s31 = sadd.s32 0, 0
    %p32 = scmp.lt.s32.totalorder %s31, 0
    %s33 = scalar_select %p32, %s31, 0
    %s34 = smul.u32 4, %s33
  $region9: #{tpu_custom_call.1} parent=0 // pred_fallthru
    _
  %s35 = sadd.s32 0, 0
  %p36 = scmp.lt.s32.totalorder %s35, 0
  %s37 = scalar_select %p36, %s35, 0
  %s38 = smul.u32 4, %s37
  %p39 = scmp.lt.s32.totalorder %s38, 3
  %s40 = scalar_select %p39, %s38, 3
  %s41 = smul.addr %s40, 8
  %s42 = scalar_lea.vmem %s0, %s41
  %s43 = sadd.s32 0, 0
  %p44 = scmp.lt.s32.totalorder %s43, 0
  %s45 = scalar_select %p44, %s43, 0
  %s46 = smul.u32 4, %s45
  %p47 = scmp.lt.s32.totalorder %s46, 3
  %s48 = scalar_select %p47, %s46, 3
  %s49 = smul.addr %s48, 8
  %s50 = scalar_lea.vmem %s1, %s49
  %s51 = sadd.s32 0, 0
  %p52 = scmp.lt.s32.totalorder %s51, 0
  %s53 = scalar_select %p52, %s51, 0
  %s54 = smul.u32 4, %s53
  %p55 = scmp.lt.s32.totalorder %s54, 3
  %s56 = scalar_select %p55, %s54, 3
  %s57 = smul.addr %s56, 8
  %s58 = scalar_lea.vmem %s0, %s57
  %s59 = sadd.s32 0, 0
  %p60 = scmp.lt.s32.totalorder %s59, 0
  %s61 = scalar_select %p60, %s59, 0
  %s62 = smul.u32 4, %s61
  %s63 = sadd.s32 0, 0
  %p64 = scmp.lt.s32.totalorder %s63, 0
  %s65 = scalar_select %p64, %s63, 0
  %s66 = smul.u32 4, %s65
  %p67 = scmp.lt.s32.totalorder %s66, 3
  %s68 = scalar_select %p67, %s66, 3
  %s69 = smul.addr %s68, 8
  %s70 = scalar_lea.vmem %s1, %s69
  %s71 = sadd.s32 0, 0
  %p72 = scmp.lt.s32.totalorder %s71, 0
  %s73 = scalar_select %p72, %s71, 0
  %s74 = smul.u32 4, %s73
  %p75 = scmp.eq.s32.totalorder 0, 0
  %p76 = scmp.eq.s32.totalorder 0, 0
  %p77 = pnand %p75, %p76
  %p78 = pneg %p77
  // Predicated region
  $region10: #{tpu_custom_call.1} parent=0 // pred_check
    _
  $region11: #{tpu_custom_call.1} parent=0 // pred_check_branch
    %80 = sbr.rel (%p77) target = $region13
  $region12: #{tpu_custom_call.1} parent=0 // pred_region
    %vm81 = vcmask 7168
    %82 = vst.msk [vmem:[%s2] sm:$0xff] %vm81, 0.0
    %83 = vst.msk [vmem:[%s2 + $0x8] sm:$0xff] %vm81, 0.0
    %84 = vst.msk [vmem:[%s2 + $0x10] sm:$0xff] %vm81, 0.0
    %85 = vst.msk [vmem:[%s2 + $0x18] sm:$0xff] %vm81, 0.0
  $region13: #{tpu_custom_call.1} parent=0 // pred_fallthru
    _
  // Predicated region
  $region14: #{tpu_custom_call.1} parent=0 // pred_check
    %p86 = pneg %p76
  $region15: #{tpu_custom_call.1} parent=0 // pred_check_branch
    %88 = sbr.rel (%p86) target = $region17
  $region16: #{tpu_custom_call.1} parent=0 // pred_region
    %vm89 = vcmask 7168
    %90 = vst.msk [vmem:[#allocation2] sm:$0xff] %vm89, -inf
    %91 = vst.msk [vmem:[#allocation2 + $0x8] sm:$0xff] %vm89, -inf
    %92 = vst.msk [vmem:[#allocation2 + $0x10] sm:$0xff] %vm89, -inf
    %93 = vst.msk [vmem:[#allocation2 + $0x18] sm:$0xff] %vm89, -inf
    %94 = vst.msk [vmem:[#allocation3] sm:$0xff] %vm89, 0.0
    %95 = vst.msk [vmem:[#allocation3 + $0x8] sm:$0xff] %vm89, 0.0
    %96 = vst.msk [vmem:[#allocation3 + $0x10] sm:$0xff] %vm89, 0.0
    %97 = vst.msk [vmem:[#allocation3 + $0x18] sm:$0xff] %vm89, 0.0
    %98 = vst.msk [vmem:[#allocation4] sm:$0xff] %vm89, 0.0
    %99 = vst.msk [vmem:[#allocation4 + $0x8] sm:$0xff] %vm89, 0.0
    %100 = vst.msk [vmem:[#allocation4 + $0x10] sm:$0xff] %vm89, 0.0
    %101 = vst.msk [vmem:[#allocation4 + $0x18] sm:$0xff] %vm89, 0.0
  $region17: #{tpu_custom_call.1} parent=0 // pred_fallthru
    _
  %v102 = vld [vmem:[%s58] sm:$0xff]
  %v103 = vld [vmem:[%s58 + $0x8] sm:$0xff]
  %v104 = vld [vmem:[%s58 + $0x10] sm:$0xff]
  %v105 = vld [vmem:[%s58 + $0x18] sm:$0xff]
  %v106 = vld [vmem:[%s70] sm:$0xff]
  %v107 = vld [vmem:[%s70 + $0x8] sm:$0xff]
  %v108 = vld [vmem:[%s70 + $0x10] sm:$0xff]
  %v109 = vld [vmem:[%s70 + $0x18] sm:$0xff]
  %s110 = smul.u32 0, 32
  %v111 = vlaneseq
  %v112 = vand.u32 %v111, 127
  %v113 = vstv %s110
  %v114 = vadd.s32 %v113, %v112
  %v115 = vld [vmem:[#allocation2] sm:$0xff]
  %v116 = vld [vmem:[#allocation2 + $0x8] sm:$0xff]
  %v117 = vld [vmem:[#allocation2 + $0x10] sm:$0xff]
  %v118 = vld [vmem:[#allocation2 + $0x18] sm:$0xff]
  %vm119 = vcmask 261120
  %v120 = vsel %vm119, %v102, -inf
  %121 = vmax.xlane.f32.xlu0 %v120
  %v122 = vpop.xlane.xlu0 %121
  %v123 = vsel %vm119, %v103, -inf
  %124 = vmax.xlane.f32.xlu0 %v123
  %v125 = vpop.xlane.xlu0 %124
  %v126 = vsel %vm119, %v104, -inf
  %127 = vmax.xlane.f32.xlu0 %v126
  %v128 = vpop.xlane.xlu0 %127
  %v129 = vsel %vm119, %v105, -inf
  %130 = vmax.xlane.f32.xlu0 %v129
  %v131 = vpop.xlane.xlu0 %130
  %v132 = vmax.f32 %v115, %v122
  %v133 = vmax.f32 %v116, %v125
  %v134 = vmax.f32 %v117, %v128
  %v135 = vmax.f32 %v118, %v131
  %v136 = vsub.f32 %v115, %v132
  %v137 = vsub.f32 %v116, %v133
  %v138 = vsub.f32 %v117, %v134
  %v139 = vsub.f32 %v118, %v135
  %v140 = vmul.f32 %v136, 1.442695
  %v141 = vpow.pop %v140
  %v142 = vmul.f32 %v137, 1.442695
  %v143 = vpow.pop %v142
  %v144 = vmul.f32 %v138, 1.442695
  %v145 = vpow.pop %v144
  %v146 = vmul.f32 %v139, 1.442695
  %v147 = vpow.pop %v146
  %v148 = vld [vmem:[#allocation3] sm:$0xff]
  %v149 = vld [vmem:[#allocation3 + $0x8] sm:$0xff]
  %v150 = vld [vmem:[#allocation3 + $0x10] sm:$0xff]
  %v151 = vld [vmem:[#allocation3 + $0x18] sm:$0xff]
  %v152 = vmul.f32 %v148, %v141
  %v153 = vmul.f32 %v149, %v143
  %v154 = vmul.f32 %v150, %v145
  %v155 = vmul.f32 %v151, %v147
  %157 = vset.pattern.permute.xlu0 0
  %158 = vperm.xlu0 %157, %v132
  %v159 = vpop.permute.xlu0 %158
  %162 = vset.pattern.permute.xlu0 0
  %163 = vperm.xlu0 %162, %v133
  %v164 = vpop.permute.xlu0 %163
  %167 = vset.pattern.permute.xlu0 0
  %168 = vperm.xlu0 %167, %v134
  %v169 = vpop.permute.xlu0 %168
  %172 = vset.pattern.permute.xlu0 0
  %173 = vperm.xlu0 %172, %v135
  %v174 = vpop.permute.xlu0 %173
  %v176 = vsub.f32 %v102, %v159
  %v177 = vsub.f32 %v103, %v164
  %v178 = vsub.f32 %v104, %v169
  %v179 = vsub.f32 %v105, %v174
  %v180 = vmul.f32 %v176, 1.442695
  %v181 = vpow.pop %v180
  %v182 = vmul.f32 %v177, 1.442695
  %v183 = vpow.pop %v182
  %v184 = vmul.f32 %v178, 1.442695
  %v185 = vpow.pop %v184
  %v186 = vmul.f32 %v179, 1.442695
  %v187 = vpow.pop %v186
  %v188 = vsel %vm119, %v181, 0.0
  %189 = vadd.xlane.f32.xlu0 %v188
  %v190 = vpop.xlane.xlu0 %189
  %v191 = vsel %vm119, %v183, 0.0
  %192 = vadd.xlane.f32.xlu0 %v191
  %v193 = vpop.xlane.xlu0 %192
  %v194 = vsel %vm119, %v185, 0.0
  %195 = vadd.xlane.f32.xlu0 %v194
  %v196 = vpop.xlane.xlu0 %195
  %v197 = vsel %vm119, %v187, 0.0
  %198 = vadd.xlane.f32.xlu0 %v197
  %v199 = vpop.xlane.xlu0 %198
  %v200 = vadd.f32 %v152, %v190
  %v201 = vadd.f32 %v153, %v193
  %v202 = vadd.f32 %v154, %v196
  %v203 = vadd.f32 %v155, %v199
  %vm204 = vcmask 7168
  %205 = vst.msk [vmem:[#allocation3] sm:$0xff] %vm204, %v200
  %206 = vst.msk [vmem:[#allocation3 + $0x8] sm:$0xff] %vm204, %v201
  %207 = vst.msk [vmem:[#allocation3 + $0x10] sm:$0xff] %vm204, %v202
  %208 = vst.msk [vmem:[#allocation3 + $0x18] sm:$0xff] %vm204, %v203
  %209 = vst.msk [vmem:[#allocation2] sm:$0xff] %vm204, %v132
  %210 = vst.msk [vmem:[#allocation2 + $0x8] sm:$0xff] %vm204, %v133
  %211 = vst.msk [vmem:[#allocation2 + $0x10] sm:$0xff] %vm204, %v134
  %212 = vst.msk [vmem:[#allocation2 + $0x18] sm:$0xff] %vm204, %v135
  %213 = vset.pattern.permute.xlu0 0
  %214 = vperm.xlu0 %213, %v106
  %v215 = vpop.permute.xlu0 %214
  %216 = vset.pattern.permute.xlu0 0
  %217 = vperm.xlu0 %216, %v107
  %v218 = vpop.permute.xlu0 %217
  %219 = vset.pattern.permute.xlu0 0
  %220 = vperm.xlu0 %219, %v108
  %v221 = vpop.permute.xlu0 %220
  %222 = vset.pattern.permute.xlu0 0
  %223 = vperm.xlu0 %222, %v109
  %v224 = vpop.permute.xlu0 %223
  %vm225 = vcmp.eq.s32.totalorder %v114, %v215
  %vm226 = vcmp.eq.s32.totalorder %v114, %v218
  %vm227 = vcmp.eq.s32.totalorder %v114, %v221
  %vm228 = vcmp.eq.s32.totalorder %v114, %v224
  %v229 = vsel %vm225, %v102, 0.0
  %v230 = vsel %vm226, %v103, 0.0
  %v231 = vsel %vm227, %v104, 0.0
  %v232 = vsel %vm228, %v105, 0.0
  %v233 = vld [vmem:[#allocation4] sm:$0xff]
  %v234 = vld [vmem:[#allocation4 + $0x8] sm:$0xff]
  %v235 = vld [vmem:[#allocation4 + $0x10] sm:$0xff]
  %v236 = vld [vmem:[#allocation4 + $0x18] sm:$0xff]
  %v237 = vsel %vm119, %v229, 0.0
  %238 = vadd.xlane.f32.xlu0 %v237
  %v239 = vpop.xlane.xlu0 %238
  %v240 = vsel %vm119, %v230, 0.0
  %241 = vadd.xlane.f32.xlu0 %v240
  %v242 = vpop.xlane.xlu0 %241
  %v243 = vsel %vm119, %v231, 0.0
  %244 = vadd.xlane.f32.xlu0 %v243
  %v245 = vpop.xlane.xlu0 %244
  %v246 = vsel %vm119, %v232, 0.0
  %247 = vadd.xlane.f32.xlu0 %v246
  %v248 = vpop.xlane.xlu0 %247
  %v249 = vadd.f32 %v233, %v239
  %v250 = vadd.f32 %v234, %v242
  %v251 = vadd.f32 %v235, %v245
  %v252 = vadd.f32 %v236, %v248
  %253 = vst.msk [vmem:[#allocation4] sm:$0xff] %vm204, %v249
  %254 = vst.msk [vmem:[#allocation4 + $0x8] sm:$0xff] %vm204, %v250
  %255 = vst.msk [vmem:[#allocation4 + $0x10] sm:$0xff] %vm204, %v251
  %256 = vst.msk [vmem:[#allocation4 + $0x18] sm:$0xff] %vm204, %v252
  // Predicated region
  $region18: #{tpu_custom_call.1} parent=0 // pred_check
    %p257 = pneg %p76
  $region19: #{tpu_custom_call.1} parent=0 // pred_check_branch
    %259 = sbr.rel (%p257) target = $region21
  $region20: #{tpu_custom_call.1} parent=0 // pred_region
    %v260 = vld [vmem:[#allocation2] sm:$0xff]
    %v261 = vld [vmem:[#allocation2 + $0x8] sm:$0xff]
    %v262 = vld [vmem:[#allocation2 + $0x10] sm:$0xff]
    %v263 = vld [vmem:[#allocation2 + $0x18] sm:$0xff]
    %v264 = vld [vmem:[#allocation3] sm:$0xff]
    %v265 = vld [vmem:[#allocation3 + $0x8] sm:$0xff]
    %v266 = vld [vmem:[#allocation3 + $0x10] sm:$0xff]
    %v267 = vld [vmem:[#allocation3 + $0x18] sm:$0xff]
    %v268 = vlog2.pop %v264
    %v269 = vmul.f32 %v268, 0.6931472
    %v270 = vlog2.pop %v265
    %v271 = vmul.f32 %v270, 0.6931472
    %v272 = vlog2.pop %v266
    %v273 = vmul.f32 %v272, 0.6931472
    %v274 = vlog2.pop %v267
    %v275 = vmul.f32 %v274, 0.6931472
    %v276 = vadd.f32 %v260, %v269
    %v277 = vadd.f32 %v261, %v271
    %v278 = vadd.f32 %v262, %v273
    %v279 = vadd.f32 %v263, %v275
    %v280 = vlaneseq
    %v281 = vshrl.u32 %v280, 7
    %v282 = vadd.s32 %v281, 8
    %v283 = vadd.s32 %v281, 16
    %v284 = vadd.s32 %v281, 24
    %s285 = sadd.s32 0, 0
    %s286 = smul.u32 %s285, 32
    %v287 = vstv %s286
    %v288 = vadd.s32 %v287, %v281
    %v289 = vadd.s32 %v287, %v282
    %v290 = vadd.s32 %v287, %v283
    %v291 = vadd.s32 %v287, %v284
    %vm292 = vcmp.lt.s32.totalorder %v288, 32
    %vm293 = vcmp.lt.s32.totalorder %v289, 32
    %vm294 = vcmp.lt.s32.totalorder %v290, 32
    %vm295 = vcmp.lt.s32.totalorder %v291, 32
    %v296 = vld [vmem:[%s2] sm:$0xff]
    %v297 = vld [vmem:[%s2 + $0x8] sm:$0xff]
    %v298 = vld [vmem:[%s2 + $0x10] sm:$0xff]
    %v299 = vld [vmem:[%s2 + $0x18] sm:$0xff]
    %v300 = vld [vmem:[#allocation4] sm:$0xff]
    %v301 = vld [vmem:[#allocation4 + $0x8] sm:$0xff]
    %v302 = vld [vmem:[#allocation4 + $0x10] sm:$0xff]
    %v303 = vld [vmem:[#allocation4 + $0x18] sm:$0xff]
    %v304 = vsub.f32 %v276, %v300
    %v305 = vsub.f32 %v277, %v301
    %v306 = vsub.f32 %v278, %v302
    %v307 = vsub.f32 %v279, %v303
    %v308 = vsel %vm292, %v304, 0.0
    %v309 = vsel %vm293, %v305, 0.0
    %v310 = vsel %vm294, %v306, 0.0
    %v311 = vsel %vm295, %v307, 0.0
    %v312 = vadd.f32 %v296, %v308
    %v313 = vadd.f32 %v297, %v309
    %v314 = vadd.f32 %v298, %v310
    %v315 = vadd.f32 %v299, %v311
    %316 = vst.msk [vmem:[%s2] sm:$0xff] %vm204, %v312
    %317 = vst.msk [vmem:[%s2 + $0x8] sm:$0xff] %vm204, %v313
    %318 = vst.msk [vmem:[%s2 + $0x10] sm:$0xff] %vm204, %v314
    %319 = vst.msk [vmem:[%s2 + $0x18] sm:$0xff] %vm204, %v315
  $region21: #{tpu_custom_call.1} parent=0 // pred_fallthru
    _
  // Predicated region
  $region22: #{tpu_custom_call.1} parent=0 // pred_check
    _
  $region23: #{tpu_custom_call.1} parent=0 // pred_check_branch
    %321 = sbr.rel (0) target = $region25
  $region24: #{tpu_custom_call.1} parent=0 // pred_region
    _
  $region25: #{tpu_custom_call.1} parent=0 // pred_fallthru
    _
  // Predicated region
  $region26: #{tpu_custom_call.1} parent=0 // pred_check
    _
  $region27: #{tpu_custom_call.1} parent=0 // pred_check_branch
    %323 = sbr.rel (0) target = $region29
  $region28: #{tpu_custom_call.1} parent=0 // pred_region
    _
  $region29: #{tpu_custom_call.1} parent=0 // pred_fallthru
    _

</llo_original>
